<compile_context>
chip_gen: v7x
topology: tpu7x:2x2x1
jax: 0.10.0
libtpu: 0.0.40
codegen_flags: <defaults>
</compile_context>

<pallas_src>
import functools
import math

import jax
import jax.numpy as jnp
from jax.experimental import pallas as pl
from jax.experimental.pallas import tpu as pltpu

NEG_SLOPE = 0.01      # PyTorch F.leaky_relu default
F_PAD = 128           # lane-dense padded feature width used for every layer
N_LAYERS = 5          # input layer + h1..h3 + output layer


def _leaky_relu(x):
    return jnp.where(x > 0, x, NEG_SLOPE * x)


def _round_up(n, m):
    return ((n + m - 1) // m) * m


def _mlp_kernel(t_ref, x_ref, u_ref, w_ref, b_ref, out_ref, xin_ref, *,
                x_dim, u_dim):
    """Fused forward pass for one batch tile.

    - In-kernel concat of (t, x, u) into a zero-initialized [TB, 128] VMEM
      scratch; the padded lanes only ever multiply zero-padded weight rows,
      so they contribute nothing.
    - 5 lane-dense [TB,128] @ [128,128] MXU dots + leaky_relu on the VPU.
    - One lane-dense [TB, 128] output slab; the ctg/constraint column split
      happens in the JAX wrapper.
    """
    # In-kernel concat (zero-init so stale VMEM garbage can't leak NaNs).
    xin_ref[...] = jnp.zeros_like(xin_ref)
    xin_ref[:, 0:1] = t_ref[...]
    xin_ref[:, 1:1 + x_dim] = x_ref[...]
    xin_ref[:, 1 + x_dim:1 + x_dim + u_dim] = u_ref[...]

    h = xin_ref[...]
    # TODO(synk): on v6e/v7x the 10-wide hidden layers could be evaluated as
    # VPU broadcast-FMAs to avoid serial MXU result-FIFO round trips.
    for layer in range(N_LAYERS - 1):
        h = _leaky_relu(
            jnp.dot(h, w_ref[layer], preferred_element_type=jnp.float32)
            + b_ref[layer])
    out_ref[...] = (jnp.dot(h, w_ref[N_LAYERS - 1],
                            preferred_element_type=jnp.float32)
                    + b_ref[N_LAYERS - 1])


def pack_params(params):
    """Pack the 5 (W, b) pairs into two zero-padded slabs.

    W slab: f32[5, 128, 128]  (W stored as [in_features, out_features])
    b slab: f32[5, 1, 128]
    Padding with zeros keeps padded lanes exactly zero through every layer
    (bias 0 -> leaky_relu(0) = 0 -> multiplied by zero weight rows).
    """
    w_packed = jnp.zeros((N_LAYERS, F_PAD, F_PAD), jnp.float32)
    b_packed = jnp.zeros((N_LAYERS, 1, F_PAD), jnp.float32)
    for l, (w, b) in enumerate(params):
        fi, fo = w.shape
        assert fi <= F_PAD and fo <= F_PAD
        w_packed = w_packed.at[l, :fi, :fo].set(w.astype(jnp.float32))
        b_packed = b_packed.at[l, 0, :fo].set(b.reshape(-1).astype(jnp.float32))
    return w_packed, b_packed


def net_forward(t_in, x_in, u_in, w_packed, b_packed, *, batch_tile=256):
    """JAX wrapper: batch-tiled pallas_call; only padding/slicing glue here."""
    B = t_in.shape[0]
    x_dim = x_in.shape[1]
    u_dim = u_in.shape[1]

    t_in = t_in.astype(jnp.float32)
    x_in = x_in.astype(jnp.float32)
    u_in = u_in.astype(jnp.float32)

    # Batch tile: multiple of 8 sublanes, capped by the (padded) batch size.
    tb = min(batch_tile, _round_up(B, 8))
    b_pad = _round_up(B, tb)
    if b_pad != B:
        pad_rows = lambda a: jnp.pad(a, ((0, b_pad - B), (0, 0)))
        t_in, x_in, u_in = pad_rows(t_in), pad_rows(x_in), pad_rows(u_in)

    kernel = functools.partial(_mlp_kernel, x_dim=x_dim, u_dim=u_dim)

    out = pl.pallas_call(
        kernel,
        out_shape=jax.ShapeDtypeStruct((b_pad, F_PAD), jnp.float32),
        grid=(b_pad // tb,),
        in_specs=[
            pl.BlockSpec((tb, 1), lambda i: (i, 0)),
            pl.BlockSpec((tb, x_dim), lambda i: (i, 0)),
            pl.BlockSpec((tb, u_dim), lambda i: (i, 0)),
            # Weight / bias slabs stay VMEM-resident across all batch tiles.
            pl.BlockSpec((N_LAYERS, F_PAD, F_PAD), lambda i: (0, 0, 0)),
            pl.BlockSpec((N_LAYERS, 1, F_PAD), lambda i: (0, 0, 0)),
        ],
        out_specs=pl.BlockSpec((tb, F_PAD), lambda i: (i, 0)),
        scratch_shapes=[pltpu.VMEM((tb, F_PAD), jnp.float32)],
        compiler_params=pltpu.CompilerParams(
            dimension_semantics=("parallel",)),  # batch tiles shard across TCs on v7x
    )(t_in, x_in, u_in, w_packed, b_packed)

    ctg = out[:B, 0:1]
    constraint = out[:B, 1:2]
    return ctg, constraint


def init_params(key, x_dim, u_dim, hidden_size=10):
    """Deterministic init mimicking nn.Linear + kaiming_uniform_ on weights.

    Weights are stored as [in_features, out_features] (transpose of PyTorch's
    [out, in]); biases stored as [1, out_features].
    """
    dims = [x_dim + u_dim + 1, hidden_size, hidden_size, hidden_size,
            hidden_size, 2]
    params = []
    for i in range(N_LAYERS):
        fan_in, fan_out = dims[i], dims[i + 1]
        key, kw, kb = jax.random.split(key, 3)
        # kaiming_uniform_ default: a=0 -> gain=sqrt(2), bound = gain*sqrt(3/fan_in)
        w_bound = math.sqrt(2.0) * math.sqrt(3.0 / fan_in)
        w = jax.random.uniform(kw, (fan_in, fan_out), jnp.float32, -w_bound, w_bound)
        # nn.Linear default bias init: U(-1/sqrt(fan_in), 1/sqrt(fan_in))
        b_bound = 1.0 / math.sqrt(fan_in)
        b = jax.random.uniform(kb, (1, fan_out), jnp.float32, -b_bound, b_bound)
        params.append((w, b))
    return params


def reference_forward(t_in, x_in, u_in, params):
    """Pure-JAX reference for correctness check."""
    x = jnp.concatenate([t_in, x_in, u_in], axis=1).astype(jnp.float32)
    (w0, b0), (w1, b1), (w2, b2), (w3, b3), (w4, b4) = params
    h = _leaky_relu(x @ w0 + b0)
    h = _leaky_relu(h @ w1 + b1)
    h = _leaky_relu(h @ w2 + b2)
    h = _leaky_relu(h @ w3 + b3)
    out = h @ w4 + b4
    return out[:, 0:1], out[:, 1:2]


if __name__ == "__main__":
    key = jax.random.PRNGKey(0)
    B, x_dim, u_dim, hidden = 8, 4, 2, 10

    key, k_t, k_x, k_u, k_p = jax.random.split(key, 5)
    t_in = jax.random.uniform(k_t, (B, 1), jnp.float32)
    x_in = jax.random.normal(k_x, (B, x_dim), jnp.float32)
    u_in = jax.random.normal(k_u, (B, u_dim), jnp.float32)

    params = init_params(k_p, x_dim, u_dim, hidden)
    w_packed, b_packed = pack_params(params)  # one-time packing outside the hot path

    ctg, constraint = net_forward(t_in, x_in, u_in, w_packed, b_packed)
    jax.block_until_ready((ctg, constraint))

    ctg_ref, con_ref = reference_forward(t_in, x_in, u_in, params)
    assert ctg.shape == (B, 1) and constraint.shape == (B, 1)
    assert jnp.allclose(ctg, ctg_ref, atol=1e-5, rtol=1e-5)
    assert jnp.allclose(constraint, con_ref, atol=1e-5, rtol=1e-5)

    print("KERNEL_OK")
</pallas_src>

<mosaic_0001>
module attributes {stable_mosaic.version = 11 : i64} {
  func.func @_mlp_kernel(%arg0: i32, %arg1: memref<8x1xf32, #tpu.memory_space<vmem>>, %arg2: memref<8x4xf32, #tpu.memory_space<vmem>>, %arg3: memref<8x2xf32, #tpu.memory_space<vmem>>, %arg4: memref<5x128x128xf32, #tpu.memory_space<vmem>>, %arg5: memref<5x1x128xf32, #tpu.memory_space<vmem>>, %arg6: memref<8x128xf32, #tpu.memory_space<vmem>>, %arg7: memref<8x128xf32, #tpu.memory_space<vmem>>) attributes {dimension_semantics = [#tpu.dimension_semantics<parallel>], iteration_bounds = array<i64: 1>, scalar_prefetch = 0 : i64, scratch_operands = 1 : i64, tpu.core_type = #tpu.core_type<tc>, window_params = [{transform_indices = @transform_0, window_bounds = array<i64: 8, 1>}, {transform_indices = @transform_1, window_bounds = array<i64: 8, 4>}, {transform_indices = @transform_2, window_bounds = array<i64: 8, 2>}, {pipeline_mode = #tpu.pipeline_mode<synchronous>, transform_indices = @transform_3, window_bounds = array<i64: 5, 128, 128>}, {pipeline_mode = #tpu.pipeline_mode<synchronous>, transform_indices = @transform_4, window_bounds = array<i64: 5, 1, 128>}, {transform_indices = @transform_5, window_bounds = array<i64: 8, 128>}]} {
    %cst = arith.constant 0.000000e+00 : f32
    %0 = vector.broadcast %cst : f32 to vector<8x128xf32>
    %c0 = arith.constant 0 : index
    %c0_0 = arith.constant 0 : index
    %1 = vector.load %arg7[%c0, %c0_0] : memref<8x128xf32, #tpu.memory_space<vmem>>, vector<8x128xf32>
    tpu.vector_store %arg7[%c0, %c0_0], %0 {strides = array<i32>} : memref<8x128xf32, #tpu.memory_space<vmem>>, vector<8x128xf32>,
    %c0_1 = arith.constant 0 : index
    %c0_2 = arith.constant 0 : index
    %2 = vector.load %arg1[%c0_1, %c0_2] : memref<8x1xf32, #tpu.memory_space<vmem>>, vector<8x1xf32>
    %c0_3 = arith.constant 0 : index
    %c0_4 = arith.constant 0 : index
    %3 = vector.load %arg7[%c0_3, %c0_4] : memref<8x128xf32, #tpu.memory_space<vmem>>, vector<8x1xf32>
    tpu.vector_store %arg7[%c0_3, %c0_4], %2 {strides = array<i32>} : memref<8x128xf32, #tpu.memory_space<vmem>>, vector<8x1xf32>,
    %c0_5 = arith.constant 0 : index
    %c0_6 = arith.constant 0 : index
    %4 = vector.load %arg2[%c0_5, %c0_6] : memref<8x4xf32, #tpu.memory_space<vmem>>, vector<8x4xf32>
    %c0_7 = arith.constant 0 : index
    %c1 = arith.constant 1 : index
    %5 = vector.load %arg7[%c0_7, %c1] : memref<8x128xf32, #tpu.memory_space<vmem>>, vector<8x4xf32>
    tpu.vector_store %arg7[%c0_7, %c1], %4 {strides = array<i32>} : memref<8x128xf32, #tpu.memory_space<vmem>>, vector<8x4xf32>,
    %c0_8 = arith.constant 0 : index
    %c0_9 = arith.constant 0 : index
    %6 = vector.load %arg3[%c0_8, %c0_9] : memref<8x2xf32, #tpu.memory_space<vmem>>, vector<8x2xf32>
    %c0_10 = arith.constant 0 : index
    %c5 = arith.constant 5 : index
    %7 = vector.load %arg7[%c0_10, %c5] : memref<8x128xf32, #tpu.memory_space<vmem>>, vector<8x2xf32>
    tpu.vector_store %arg7[%c0_10, %c5], %6 {strides = array<i32>} : memref<8x128xf32, #tpu.memory_space<vmem>>, vector<8x2xf32>,
    %c0_11 = arith.constant 0 : index
    %c0_12 = arith.constant 0 : index
    %8 = vector.load %arg7[%c0_11, %c0_12] : memref<8x128xf32, #tpu.memory_space<vmem>>, vector<8x128xf32>
    %c0_13 = arith.constant 0 : index
    %c0_14 = arith.constant 0 : index
    %c0_15 = arith.constant 0 : index
    %9 = vector.load %arg4[%c0_13, %c0_14, %c0_15] : memref<5x128x128xf32, #tpu.memory_space<vmem>>, vector<1x128x128xf32>
    %10 = vector.shape_cast %9 : vector<1x128x128xf32> to vector<128x128xf32>
    %cst_16 = arith.constant dense<0.000000e+00> : vector<8x128xf32>
    %11 = tpu.matmul %8, %10, %cst_16 {dimension_numbers = #tpu.dot_dimension_numbers<[1], [0], [0], [1], [0, 0, 1, 1], [], []>} : vector<8x128xf32>, vector<128x128xf32>, vector<8x128xf32> -> vector<8x128xf32>
    %c0_17 = arith.constant 0 : index
    %c0_18 = arith.constant 0 : index
    %c0_19 = arith.constant 0 : index
    %12 = vector.load %arg5[%c0_17, %c0_18, %c0_19] : memref<5x1x128xf32, #tpu.memory_space<vmem>>, vector<1x1x128xf32>
    %13 = vector.shape_cast %12 : vector<1x1x128xf32> to vector<1x128xf32>
    %14 = vector.broadcast %13 : vector<1x128xf32> to vector<8x128xf32>
    %15 = arith.addf %11, %14 : vector<8x128xf32>
    %cst_20 = arith.constant 0.000000e+00 : f32
    %16 = vector.broadcast %cst_20 : f32 to vector<8x128xf32>
    %17 = arith.cmpf ogt, %15, %16 : vector<8x128xf32>
    %cst_21 = arith.constant 0.00999999977 : f32
    %18 = vector.broadcast %cst_21 : f32 to vector<8x128xf32>
    %19 = arith.mulf %18, %15 : vector<8x128xf32>
    %20 = arith.select %17, %15, %19 : vector<8x128xi1>, vector<8x128xf32>
    %c1_22 = arith.constant 1 : index
    %c0_23 = arith.constant 0 : index
    %c0_24 = arith.constant 0 : index
    %21 = vector.load %arg4[%c1_22, %c0_23, %c0_24] : memref<5x128x128xf32, #tpu.memory_space<vmem>>, vector<1x128x128xf32>
    %22 = vector.shape_cast %21 : vector<1x128x128xf32> to vector<128x128xf32>
    %cst_25 = arith.constant dense<0.000000e+00> : vector<8x128xf32>
    %23 = tpu.matmul %20, %22, %cst_25 {dimension_numbers = #tpu.dot_dimension_numbers<[1], [0], [0], [1], [0, 0, 1, 1], [], []>} : vector<8x128xf32>, vector<128x128xf32>, vector<8x128xf32> -> vector<8x128xf32>
    %c1_26 = arith.constant 1 : index
    %c0_27 = arith.constant 0 : index
    %c0_28 = arith.constant 0 : index
    %24 = vector.load %arg5[%c1_26, %c0_27, %c0_28] : memref<5x1x128xf32, #tpu.memory_space<vmem>>, vector<1x1x128xf32>
    %25 = vector.shape_cast %24 : vector<1x1x128xf32> to vector<1x128xf32>
    %26 = vector.broadcast %25 : vector<1x128xf32> to vector<8x128xf32>
    %27 = arith.addf %23, %26 : vector<8x128xf32>
    %cst_29 = arith.constant 0.000000e+00 : f32
    %28 = vector.broadcast %cst_29 : f32 to vector<8x128xf32>
    %29 = arith.cmpf ogt, %27, %28 : vector<8x128xf32>
    %cst_30 = arith.constant 0.00999999977 : f32
    %30 = vector.broadcast %cst_30 : f32 to vector<8x128xf32>
    %31 = arith.mulf %30, %27 : vector<8x128xf32>
    %32 = arith.select %29, %27, %31 : vector<8x128xi1>, vector<8x128xf32>
    %c2 = arith.constant 2 : index
    %c0_31 = arith.constant 0 : index
    %c0_32 = arith.constant 0 : index
    %33 = vector.load %arg4[%c2, %c0_31, %c0_32] : memref<5x128x128xf32, #tpu.memory_space<vmem>>, vector<1x128x128xf32>
    %34 = vector.shape_cast %33 : vector<1x128x128xf32> to vector<128x128xf32>
    %cst_33 = arith.constant dense<0.000000e+00> : vector<8x128xf32>
    %35 = tpu.matmul %32, %34, %cst_33 {dimension_numbers = #tpu.dot_dimension_numbers<[1], [0], [0], [1], [0, 0, 1, 1], [], []>} : vector<8x128xf32>, vector<128x128xf32>, vector<8x128xf32> -> vector<8x128xf32>
    %c2_34 = arith.constant 2 : index
    %c0_35 = arith.constant 0 : index
    %c0_36 = arith.constant 0 : index
    %36 = vector.load %arg5[%c2_34, %c0_35, %c0_36] : memref<5x1x128xf32, #tpu.memory_space<vmem>>, vector<1x1x128xf32>
    %37 = vector.shape_cast %36 : vector<1x1x128xf32> to vector<1x128xf32>
    %38 = vector.broadcast %37 : vector<1x128xf32> to vector<8x128xf32>
    %39 = arith.addf %35, %38 : vector<8x128xf32>
    %cst_37 = arith.constant 0.000000e+00 : f32
    %40 = vector.broadcast %cst_37 : f32 to vector<8x128xf32>
    %41 = arith.cmpf ogt, %39, %40 : vector<8x128xf32>
    %cst_38 = arith.constant 0.00999999977 : f32
    %42 = vector.broadcast %cst_38 : f32 to vector<8x128xf32>
    %43 = arith.mulf %42, %39 : vector<8x128xf32>
    %44 = arith.select %41, %39, %43 : vector<8x128xi1>, vector<8x128xf32>
    %c3 = arith.constant 3 : index
    %c0_39 = arith.constant 0 : index
    %c0_40 = arith.constant 0 : index
    %45 = vector.load %arg4[%c3, %c0_39, %c0_40] : memref<5x128x128xf32, #tpu.memory_space<vmem>>, vector<1x128x128xf32>
    %46 = vector.shape_cast %45 : vector<1x128x128xf32> to vector<128x128xf32>
    %cst_41 = arith.constant dense<0.000000e+00> : vector<8x128xf32>
    %47 = tpu.matmul %44, %46, %cst_41 {dimension_numbers = #tpu.dot_dimension_numbers<[1], [0], [0], [1], [0, 0, 1, 1], [], []>} : vector<8x128xf32>, vector<128x128xf32>, vector<8x128xf32> -> vector<8x128xf32>
    %c3_42 = arith.constant 3 : index
    %c0_43 = arith.constant 0 : index
    %c0_44 = arith.constant 0 : index
    %48 = vector.load %arg5[%c3_42, %c0_43, %c0_44] : memref<5x1x128xf32, #tpu.memory_space<vmem>>, vector<1x1x128xf32>
    %49 = vector.shape_cast %48 : vector<1x1x128xf32> to vector<1x128xf32>
    %50 = vector.broadcast %49 : vector<1x128xf32> to vector<8x128xf32>
    %51 = arith.addf %47, %50 : vector<8x128xf32>
    %cst_45 = arith.constant 0.000000e+00 : f32
    %52 = vector.broadcast %cst_45 : f32 to vector<8x128xf32>
    %53 = arith.cmpf ogt, %51, %52 : vector<8x128xf32>
    %cst_46 = arith.constant 0.00999999977 : f32
    %54 = vector.broadcast %cst_46 : f32 to vector<8x128xf32>
    %55 = arith.mulf %54, %51 : vector<8x128xf32>
    %56 = arith.select %53, %51, %55 : vector<8x128xi1>, vector<8x128xf32>
    %c4 = arith.constant 4 : index
    %c0_47 = arith.constant 0 : index
    %c0_48 = arith.constant 0 : index
    %57 = vector.load %arg4[%c4, %c0_47, %c0_48] : memref<5x128x128xf32, #tpu.memory_space<vmem>>, vector<1x128x128xf32>
    %58 = vector.shape_cast %57 : vector<1x128x128xf32> to vector<128x128xf32>
    %cst_49 = arith.constant dense<0.000000e+00> : vector<8x128xf32>
    %59 = tpu.matmul %56, %58, %cst_49 {dimension_numbers = #tpu.dot_dimension_numbers<[1], [0], [0], [1], [0, 0, 1, 1], [], []>} : vector<8x128xf32>, vector<128x128xf32>, vector<8x128xf32> -> vector<8x128xf32>
    %c4_50 = arith.constant 4 : index
    %c0_51 = arith.constant 0 : index
    %c0_52 = arith.constant 0 : index
    %60 = vector.load %arg5[%c4_50, %c0_51, %c0_52] : memref<5x1x128xf32, #tpu.memory_space<vmem>>, vector<1x1x128xf32>
    %61 = vector.shape_cast %60 : vector<1x1x128xf32> to vector<1x128xf32>
    %62 = vector.broadcast %61 : vector<1x128xf32> to vector<8x128xf32>
    %63 = arith.addf %59, %62 : vector<8x128xf32>
    %c0_53 = arith.constant 0 : index
    %c0_54 = arith.constant 0 : index
    %64 = vector.load %arg6[%c0_53, %c0_54] : memref<8x128xf32, #tpu.memory_space<vmem>>, vector<8x128xf32>
    tpu.vector_store %arg6[%c0_53, %c0_54], %63 {strides = array<i32>} : memref<8x128xf32, #tpu.memory_space<vmem>>, vector<8x128xf32>,
    return
  }
  func.func @transform_0(%arg0: i32) -> (i32, i32) {
    %c0_i32 = arith.constant 0 : i32
    %c0_i32_0 = arith.constant 0 : i32
    return %arg0, %c0_i32 : i32, i32
  }
  func.func @transform_1(%arg0: i32) -> (i32, i32) {
    %c0_i32 = arith.constant 0 : i32
    %c0_i32_0 = arith.constant 0 : i32
    return %arg0, %c0_i32 : i32, i32
  }
  func.func @transform_2(%arg0: i32) -> (i32, i32) {
    %c0_i32 = arith.constant 0 : i32
    %c0_i32_0 = arith.constant 0 : i32
    return %arg0, %c0_i32 : i32, i32
  }
  func.func @transform_3(%arg0: i32) -> (i32, i32, i32) {
    %c0_i32 = arith.constant 0 : i32
    %c0_i32_0 = arith.constant 0 : i32
    %c0_i32_1 = arith.constant 0 : i32
    %c0_i32_2 = arith.constant 0 : i32
    return %c0_i32, %c0_i32_0, %c0_i32_1 : i32, i32, i32
  }
  func.func @transform_4(%arg0: i32) -> (i32, i32, i32) {
    %c0_i32 = arith.constant 0 : i32
    %c0_i32_0 = arith.constant 0 : i32
    %c0_i32_1 = arith.constant 0 : i32
    %c0_i32_2 = arith.constant 0 : i32
    return %c0_i32, %c0_i32_0, %c0_i32_1 : i32, i32, i32
  }
  func.func @transform_5(%arg0: i32) -> (i32, i32) {
    %c0_i32 = arith.constant 0 : i32
    %c0_i32_0 = arith.constant 0 : i32
    return %arg0, %c0_i32 : i32, i32
  }
}

</mosaic_0001>

<llo_original>
// kernel: tpu_custom_call.1
$region0: #{tpu_custom_call.1}
  #allocation0 [shape = 'u32[]', space=smem, size = 0x4, offset = 0x4, fixed_abs, tag = 'smem constant byte address 0x4 - core index']
  #allocation1 [shape = 'u32[144,128]{1,0:T(1,128)}', space=vmem, size = 0x12000, scoped, tag = 'internal scratch']
  #allocation2 [shape = 'f32[8,128]{1,0:T(8,128)}', space=vmem, size = 0x1000, scoped, tag = 'scratch operand']
  %s0 = inlined_call_operand.vmem [shape: f32[8,1], index: 0, kind: input, shape index: {}]
  %s1 = inlined_call_operand.vmem [shape: f32[8,4], index: 1, kind: input, shape index: {}]
  %s2 = inlined_call_operand.vmem [shape: f32[8,2], index: 2, kind: input, shape index: {}]
  %s3 = inlined_call_operand.hbm [shape: f32[5,128,128], index: 3, kind: input, shape index: {}]
  %s4 = inlined_call_operand.vmem [shape: f32[5,1,128], index: 4, kind: input, shape index: {}]
  %s5 = inlined_call_operand.hbm [shape: f32[8,128], index: 5, kind: output, shape index: {}]
  %s6 = sld [smem:[#allocation0]]
  $region34: #{tpu_custom_call.1} parent=0
    _
  %s8 = ssub.s32 1, %s6
  %s9 = scalar_select 0, %s8, %s6
  $region1: #{tpu_custom_call.1} parent=0
    #allocation3 [shape = 'u8[327680]{0}', space=vmem, size = 0x50000, scoped, tag = 'input window, operand 3, single buffered']
    #allocation4 [shape = 's32[1]{0}', space=sflag, size = 0x4, scoped, tag = 'scoped memory for tpu_custom_call.1']
    #allocation5 [shape = 's32[1]{0}', space=sflag, size = 0x4, scoped, tag = 'scoped memory for tpu_custom_call.1']
    #allocation6 [shape = 'u8[4096]{0}', space=vmem, size = 0x1000, scoped, tag = 'output window, operand 0, single buffered']
    %10 = vsyncpa [#allocation4], 0
    %11 = vsyncpa [#allocation5], 0
    // Predicated region
    $region2: #{tpu_custom_call.1} parent=1 // pred_check
      _
    $region3: #{tpu_custom_call.1} parent=1 // pred_check_branch
      %13 = sbr.rel (0) target = $region5
    $region4: #{tpu_custom_call.1} parent=1 // pred_region
      _
    $region5: #{tpu_custom_call.1} parent=1 // pred_fallthru
      _
    // Predicated region
    $region6: #{tpu_custom_call.1} parent=1 // pred_check
      _
    $region7: #{tpu_custom_call.1} parent=1 // pred_check_branch
      %15 = sbr.rel (0) target = $region9
    $region8: #{tpu_custom_call.1} parent=1 // pred_region
      _
    $region9: #{tpu_custom_call.1} parent=1 // pred_fallthru
      _
    // Predicated region
    $region10: #{tpu_custom_call.1} parent=1 // pred_check
      _
    $region11: #{tpu_custom_call.1} parent=1 // pred_check_branch
      %17 = sbr.rel (0) target = $region13
    $region12: #{tpu_custom_call.1} parent=1 // pred_region
      _
    $region13: #{tpu_custom_call.1} parent=1 // pred_fallthru
      _
    // Predicated region
    $region14: #{tpu_custom_call.1} parent=1 // pred_check
      _
    $region15: #{tpu_custom_call.1} parent=1 // pred_check_branch
      %19 = sbr.rel (0) target = $region17
    $region16: #{tpu_custom_call.1} parent=1 // pred_region
      %s21 = ssub.s32 10240, 10240
      %22 = vsyncadd [#allocation4], %s21
      %s23 = sshll.u32 [#allocation3], 4
      %s24 = int_to_ptr.vmem [resolvable:$true] %s23
      %29 = dma.hbm_to_vmem [thread:$0]  %s3, 10240, %s24, [#allocation4], 128, 128, 8
    $region17: #{tpu_custom_call.1} parent=1 // pred_fallthru
      _
    // Predicated region
    $region18: #{tpu_custom_call.1} parent=1 // pred_check
      _
    $region19: #{tpu_custom_call.1} parent=1 // pred_check_branch
      %31 = sbr.rel (0) target = $region21
    $region20: #{tpu_custom_call.1} parent=1 // pred_region
      _
    $region21: #{tpu_custom_call.1} parent=1 // pred_fallthru
      _
    // Predicated region
    $region22: #{tpu_custom_call.1} parent=1 // pred_check
      _
    $region23: #{tpu_custom_call.1} parent=1 // pred_check_branch
      %33 = sbr.rel (0) target = $region25
    $region24: #{tpu_custom_call.1} parent=1 // pred_region
      %34 = dma.done [#allocation4], 10240
    $region25: #{tpu_custom_call.1} parent=1 // pred_fallthru
      _
    %35 = vst [vmem:[#allocation2] sm:$0xff] 0.0
    %v36 = vld [vmem:[%s0] sm:$0xff]
    %vm37 = vcmask 7168
    %38 = vst.msk [vmem:[#allocation2] sm:$0xff] %vm37, %v36
    %v39 = vld [vmem:[%s1] sm:$0xff]
    %41 = vrot.lane.b32.xlu0 %v39, 1
    %v42 = vpop.permute.xlu0 %41
    %vm44 = vcmask 39944
    %45 = vst.msk [vmem:[#allocation2] sm:$0xff] %vm44, %v42
    %v46 = vld [vmem:[%s2] sm:$0xff]
    %48 = vrot.lane.b32.xlu0 %v46, 5
    %v49 = vpop.permute.xlu0 %48
    %vm51 = vcmask 56360
    %52 = vst.msk [vmem:[#allocation2] sm:$0xff] %vm51, %v49
    %v53 = vld [vmem:[#allocation2] sm:$0xff]
    %v54 = vld [vmem:[#allocation3] sm:$0xff]
    %v55 = vld [vmem:[#allocation3 + $0x8] sm:$0xff]
    %v56 = vld [vmem:[#allocation3 + $0x10] sm:$0xff]
    %v57 = vld [vmem:[#allocation3 + $0x18] sm:$0xff]
    %v58 = vld [vmem:[#allocation3 + $0x20] sm:$0xff]
    %v59 = vld [vmem:[#allocation3 + $0x28] sm:$0xff]
    %v60 = vld [vmem:[#allocation3 + $0x30] sm:$0xff]
    %v61 = vld [vmem:[#allocation3 + $0x38] sm:$0xff]
    %v62 = vld [vmem:[#allocation3 + $0x40] sm:$0xff]
    %v63 = vld [vmem:[#allocation3 + $0x48] sm:$0xff]
    %v64 = vld [vmem:[#allocation3 + $0x50] sm:$0xff]
    %v65 = vld [vmem:[#allocation3 + $0x58] sm:$0xff]
    %v66 = vld [vmem:[#allocation3 + $0x60] sm:$0xff]
    %v67 = vld [vmem:[#allocation3 + $0x68] sm:$0xff]
    %v68 = vld [vmem:[#allocation3 + $0x70] sm:$0xff]
    %v69 = vld [vmem:[#allocation3 + $0x78] sm:$0xff]
    %v70 = vld [vmem:[%s4] sm:$0x1]
    %v72 = vlaneseq
    %v73 = vshrl.u32 %v72, 7
    %v74 = vsub.s32 0, %v73
    %v75 = vrot.slane %v70, %v74
    %77 = vmatprep.subr.mxu0 0.0
    %78 = vmatpush1.msra.mxu0 %v54
    %79 = vmatprep.subr.mxu0 0.0
    %80 = vmatpush1.msra.mxu0 %v55
    %81 = vmatprep.subr.mxu0 0.0
    %82 = vmatpush1.msra.mxu0 %v56
    %83 = vmatprep.subr.mxu0 0.0
    %84 = vmatpush1.msra.mxu0 %v57
    %85 = vmatprep.subr.mxu0 0.0
    %86 = vmatpush1.msra.mxu0 %v58
    %87 = vmatprep.subr.mxu0 0.0
    %88 = vmatpush1.msra.mxu0 %v59
    %89 = vmatprep.subr.mxu0 0.0
    %90 = vmatpush1.msra.mxu0 %v60
    %91 = vmatprep.subr.mxu0 0.0
    %92 = vmatpush1.msra.mxu0 %v61
    %93 = vmatprep.subr.mxu0 0.0
    %94 = vmatpush1.msra.mxu0 %v62
    %95 = vmatprep.subr.mxu0 0.0
    %96 = vmatpush1.msra.mxu0 %v63
    %97 = vmatprep.subr.mxu0 0.0
    %98 = vmatpush1.msra.mxu0 %v64
    %99 = vmatprep.subr.mxu0 0.0
    %100 = vmatpush1.msra.mxu0 %v65
    %101 = vmatprep.subr.mxu0 0.0
    %102 = vmatpush1.msra.mxu0 %v66
    %103 = vmatprep.subr.mxu0 0.0
    %104 = vmatpush1.msra.mxu0 %v67
    %105 = vmatprep.subr.mxu0 0.0
    %106 = vmatpush1.msra.mxu0 %v68
    %107 = vmatprep.subr.mxu0 0.0
    %108 = vmatpush1.msra.mxu0 %v69
    %109 = vmatprep.subr.mxu0 0.0
    %110 = vmatpush1.msra.mxu0 0.0
    %111 = vmatprep.subr.mxu0 0.0
    %112 = vmatpush1.msra.mxu0 0.0
    %113 = vmatprep.subr.mxu0 0.0
    %114 = vmatpush1.msra.mxu0 0.0
    %115 = vmatprep.subr.mxu0 0.0
    %116 = vmatpush1.msra.mxu0 0.0
    %117 = vmatprep.subr.mxu0 0.0
    %118 = vmatpush1.msra.mxu0 0.0
    %119 = vmatprep.subr.mxu0 0.0
    %120 = vmatpush1.msra.mxu0 0.0
    %121 = vmatprep.subr.mxu0 0.0
    %122 = vmatpush1.msra.mxu0 0.0
    %123 = vmatprep.subr.mxu0 0.0
    %124 = vmatpush1.msra.mxu0 0.0
    %125 = vmatprep.subr.mxu0 0.0
    %126 = vmatpush1.msra.mxu0 0.0
    %127 = vmatprep.subr.mxu0 0.0
    %128 = vmatpush1.msra.mxu0 0.0
    %129 = vmatprep.subr.mxu0 0.0
    %130 = vmatpush1.msra.mxu0 0.0
    %131 = vmatprep.subr.mxu0 0.0
    %132 = vmatpush1.msra.mxu0 0.0
    %133 = vmatprep.subr.mxu0 0.0
    %134 = vmatpush1.msra.mxu0 0.0
    %135 = vmatprep.subr.mxu0 0.0
    %136 = vmatpush1.msra.mxu0 0.0
    %137 = vmatprep.subr.mxu0 0.0
    %138 = vmatpush1.msra.mxu0 0.0
    %139 = vmatprep.subr.mxu0 0.0
    %140 = vmatpush1.msra.mxu0 0.0
    %141 = vmatprep.mubr.f32.mxu0 0.0
    %142 = vmatmul.mubr.f32.gmra.mrb[0].mxu0 %v53
    %v143 = vpop.f32.mrb[0].mxu0
    %v144 = vadd.f32 %v75, %v143
    %v145 = vpop.f32.mrb[0].mxu0
    %146 = vdwg.mxu0
    %vm147 = vcmp.gt.f32.partialorder %v144, 0.0
    %v148 = vmul.f32 %v144, 0.01
    %v149 = vsel %vm147, %v144, %v148
    %s150 = scalar_lea.vmem [#allocation3], 128
    %v151 = vld [vmem:[%s150] sm:$0xff]
    %v152 = vld [vmem:[%s150 + $0x8] sm:$0xff]
    %v153 = vld [vmem:[%s150 + $0x10] sm:$0xff]
    %v154 = vld [vmem:[%s150 + $0x18] sm:$0xff]
    %v155 = vld [vmem:[%s150 + $0x20] sm:$0xff]
    %v156 = vld [vmem:[%s150 + $0x28] sm:$0xff]
    %v157 = vld [vmem:[%s150 + $0x30] sm:$0xff]
    %v158 = vld [vmem:[%s150 + $0x38] sm:$0xff]
    %v159 = vld [vmem:[%s150 + $0x40] sm:$0xff]
    %v160 = vld [vmem:[%s150 + $0x48] sm:$0xff]
    %v161 = vld [vmem:[%s150 + $0x50] sm:$0xff]
    %v162 = vld [vmem:[%s150 + $0x58] sm:$0xff]
    %v163 = vld [vmem:[%s150 + $0x60] sm:$0xff]
    %v164 = vld [vmem:[%s150 + $0x68] sm:$0xff]
    %v165 = vld [vmem:[%s150 + $0x70] sm:$0xff]
    %v166 = vld [vmem:[%s150 + $0x78] sm:$0xff]
    %s167 = scalar_lea.vmem %s4, 1
    %v168 = vld [vmem:[%s167] sm:$0x1]
    %v170 = vlaneseq
    %v171 = vshrl.u32 %v170, 7
    %v172 = vsub.s32 0, %v171
    %v173 = vrot.slane %v168, %v172
    %175 = vmatprep.subr.mxu0 0.0
    %176 = vmatpush1.msra.mxu0 %v151
    %177 = vmatprep.subr.mxu0 0.0
    %178 = vmatpush1.msra.mxu0 %v152
    %179 = vmatprep.subr.mxu0 0.0
    %180 = vmatpush1.msra.mxu0 %v153
    %181 = vmatprep.subr.mxu0 0.0
    %182 = vmatpush1.msra.mxu0 %v154
    %183 = vmatprep.subr.mxu0 0.0
    %184 = vmatpush1.msra.mxu0 %v155
    %185 = vmatprep.subr.mxu0 0.0
    %186 = vmatpush1.msra.mxu0 %v156
    %187 = vmatprep.subr.mxu0 0.0
    %188 = vmatpush1.msra.mxu0 %v157
    %189 = vmatprep.subr.mxu0 0.0
    %190 = vmatpush1.msra.mxu0 %v158
    %191 = vmatprep.subr.mxu0 0.0
    %192 = vmatpush1.msra.mxu0 %v159
    %193 = vmatprep.subr.mxu0 0.0
    %194 = vmatpush1.msra.mxu0 %v160
    %195 = vmatprep.subr.mxu0 0.0
    %196 = vmatpush1.msra.mxu0 %v161
    %197 = vmatprep.subr.mxu0 0.0
    %198 = vmatpush1.msra.mxu0 %v162
    %199 = vmatprep.subr.mxu0 0.0
    %200 = vmatpush1.msra.mxu0 %v163
    %201 = vmatprep.subr.mxu0 0.0
    %202 = vmatpush1.msra.mxu0 %v164
    %203 = vmatprep.subr.mxu0 0.0
    %204 = vmatpush1.msra.mxu0 %v165
    %205 = vmatprep.subr.mxu0 0.0
    %206 = vmatpush1.msra.mxu0 %v166
    %207 = vmatprep.subr.mxu0 0.0
    %208 = vmatpush1.msra.mxu0 0.0
    %209 = vmatprep.subr.mxu0 0.0
    %210 = vmatpush1.msra.mxu0 0.0
    %211 = vmatprep.subr.mxu0 0.0
    %212 = vmatpush1.msra.mxu0 0.0
    %213 = vmatprep.subr.mxu0 0.0
    %214 = vmatpush1.msra.mxu0 0.0
    %215 = vmatprep.subr.mxu0 0.0
    %216 = vmatpush1.msra.mxu0 0.0
    %217 = vmatprep.subr.mxu0 0.0
    %218 = vmatpush1.msra.mxu0 0.0
    %219 = vmatprep.subr.mxu0 0.0
    %220 = vmatpush1.msra.mxu0 0.0
    %221 = vmatprep.subr.mxu0 0.0
    %222 = vmatpush1.msra.mxu0 0.0
    %223 = vmatprep.subr.mxu0 0.0
    %224 = vmatpush1.msra.mxu0 0.0
    %225 = vmatprep.subr.mxu0 0.0
    %226 = vmatpush1.msra.mxu0 0.0
    %227 = vmatprep.subr.mxu0 0.0
    %228 = vmatpush1.msra.mxu0 0.0
    %229 = vmatprep.subr.mxu0 0.0
    %230 = vmatpush1.msra.mxu0 0.0
    %231 = vmatprep.subr.mxu0 0.0
    %232 = vmatpush1.msra.mxu0 0.0
    %233 = vmatprep.subr.mxu0 0.0
    %234 = vmatpush1.msra.mxu0 0.0
    %235 = vmatprep.subr.mxu0 0.0
    %236 = vmatpush1.msra.mxu0 0.0
    %237 = vmatprep.subr.mxu0 0.0
    %238 = vmatpush1.msra.mxu0 0.0
    %239 = vmatprep.mubr.f32.mxu0 0.0
    %240 = vmatmul.mubr.f32.gmra.mrb[0].mxu0 %v149
    %v241 = vpop.f32.mrb[0].mxu0
    %v242 = vadd.f32 %v173, %v241
    %v243 = vpop.f32.mrb[0].mxu0
    %244 = vdwg.mxu0
    %vm245 = vcmp.gt.f32.partialorder %v242, 0.0
    %v246 = vmul.f32 %v242, 0.01
    %v247 = vsel %vm245, %v242, %v246
    %s248 = scalar_lea.vmem [#allocation3], 256
    %v249 = vld [vmem:[%s248] sm:$0xff]
    %v250 = vld [vmem:[%s248 + $0x8] sm:$0xff]
    %v251 = vld [vmem:[%s248 + $0x10] sm:$0xff]
    %v252 = vld [vmem:[%s248 + $0x18] sm:$0xff]
    %v253 = vld [vmem:[%s248 + $0x20] sm:$0xff]
    %v254 = vld [vmem:[%s248 + $0x28] sm:$0xff]
    %v255 = vld [vmem:[%s248 + $0x30] sm:$0xff]
    %v256 = vld [vmem:[%s248 + $0x38] sm:$0xff]
    %v257 = vld [vmem:[%s248 + $0x40] sm:$0xff]
    %v258 = vld [vmem:[%s248 + $0x48] sm:$0xff]
    %v259 = vld [vmem:[%s248 + $0x50] sm:$0xff]
    %v260 = vld [vmem:[%s248 + $0x58] sm:$0xff]
    %v261 = vld [vmem:[%s248 + $0x60] sm:$0xff]
    %v262 = vld [vmem:[%s248 + $0x68] sm:$0xff]
    %v263 = vld [vmem:[%s248 + $0x70] sm:$0xff]
    %v264 = vld [vmem:[%s248 + $0x78] sm:$0xff]
    %s265 = scalar_lea.vmem %s4, 2
    %v266 = vld [vmem:[%s265] sm:$0x1]
    %v268 = vlaneseq
    %v269 = vshrl.u32 %v268, 7
    %v270 = vsub.s32 0, %v269
    %v271 = vrot.slane %v266, %v270
    %273 = vmatprep.subr.mxu0 0.0
    %274 = vmatpush1.msra.mxu0 %v249
    %275 = vmatprep.subr.mxu0 0.0
    %276 = vmatpush1.msra.mxu0 %v250
    %277 = vmatprep.subr.mxu0 0.0
    %278 = vmatpush1.msra.mxu0 %v251
    %279 = vmatprep.subr.mxu0 0.0
    %280 = vmatpush1.msra.mxu0 %v252
    %281 = vmatprep.subr.mxu0 0.0
    %282 = vmatpush1.msra.mxu0 %v253
    %283 = vmatprep.subr.mxu0 0.0
    %284 = vmatpush1.msra.mxu0 %v254
    %285 = vmatprep.subr.mxu0 0.0
    %286 = vmatpush1.msra.mxu0 %v255
    %287 = vmatprep.subr.mxu0 0.0
    %288 = vmatpush1.msra.mxu0 %v256
    %289 = vmatprep.subr.mxu0 0.0
    %290 = vmatpush1.msra.mxu0 %v257
    %291 = vmatprep.subr.mxu0 0.0
    %292 = vmatpush1.msra.mxu0 %v258
    %293 = vmatprep.subr.mxu0 0.0
    %294 = vmatpush1.msra.mxu0 %v259
    %295 = vmatprep.subr.mxu0 0.0
    %296 = vmatpush1.msra.mxu0 %v260
    %297 = vmatprep.subr.mxu0 0.0
    %298 = vmatpush1.msra.mxu0 %v261
    %299 = vmatprep.subr.mxu0 0.0
    %300 = vmatpush1.msra.mxu0 %v262
    %301 = vmatprep.subr.mxu0 0.0
    %302 = vmatpush1.msra.mxu0 %v263
    %303 = vmatprep.subr.mxu0 0.0
    %304 = vmatpush1.msra.mxu0 %v264
    %305 = vmatprep.subr.mxu0 0.0
    %306 = vmatpush1.msra.mxu0 0.0
    %307 = vmatprep.subr.mxu0 0.0
    %308 = vmatpush1.msra.mxu0 0.0
    %309 = vmatprep.subr.mxu0 0.0
    %310 = vmatpush1.msra.mxu0 0.0
    %311 = vmatprep.subr.mxu0 0.0
    %312 = vmatpush1.msra.mxu0 0.0
    %313 = vmatprep.subr.mxu0 0.0
    %314 = vmatpush1.msra.mxu0 0.0
    %315 = vmatprep.subr.mxu0 0.0
    %316 = vmatpush1.msra.mxu0 0.0
    %317 = vmatprep.subr.mxu0 0.0
    %318 = vmatpush1.msra.mxu0 0.0
    %319 = vmatprep.subr.mxu0 0.0
    %320 = vmatpush1.msra.mxu0 0.0
    %321 = vmatprep.subr.mxu0 0.0
    %322 = vmatpush1.msra.mxu0 0.0
    %323 = vmatprep.subr.mxu0 0.0
    %324 = vmatpush1.msra.mxu0 0.0
    %325 = vmatprep.subr.mxu0 0.0
    %326 = vmatpush1.msra.mxu0 0.0
    %327 = vmatprep.subr.mxu0 0.0
    %328 = vmatpush1.msra.mxu0 0.0
    %329 = vmatprep.subr.mxu0 0.0
    %330 = vmatpush1.msra.mxu0 0.0
    %331 = vmatprep.subr.mxu0 0.0
    %332 = vmatpush1.msra.mxu0 0.0
    %333 = vmatprep.subr.mxu0 0.0
    %334 = vmatpush1.msra.mxu0 0.0
    %335 = vmatprep.subr.mxu0 0.0
    %336 = vmatpush1.msra.mxu0 0.0
    %337 = vmatprep.mubr.f32.mxu0 0.0
    %338 = vmatmul.mubr.f32.gmra.mrb[0].mxu0 %v247
    %v339 = vpop.f32.mrb[0].mxu0
    %v340 = vadd.f32 %v271, %v339
    %v341 = vpop.f32.mrb[0].mxu0
    %342 = vdwg.mxu0
    %vm343 = vcmp.gt.f32.partialorder %v340, 0.0
    %v344 = vmul.f32 %v340, 0.01
    %v345 = vsel %vm343, %v340, %v344
    %s346 = scalar_lea.vmem [#allocation3], 384
    %v347 = vld [vmem:[%s346] sm:$0xff]
    %v348 = vld [vmem:[%s346 + $0x8] sm:$0xff]
    %v349 = vld [vmem:[%s346 + $0x10] sm:$0xff]
    %v350 = vld [vmem:[%s346 + $0x18] sm:$0xff]
    %v351 = vld [vmem:[%s346 + $0x20] sm:$0xff]
    %v352 = vld [vmem:[%s346 + $0x28] sm:$0xff]
    %v353 = vld [vmem:[%s346 + $0x30] sm:$0xff]
    %v354 = vld [vmem:[%s346 + $0x38] sm:$0xff]
    %v355 = vld [vmem:[%s346 + $0x40] sm:$0xff]
    %v356 = vld [vmem:[%s346 + $0x48] sm:$0xff]
    %v357 = vld [vmem:[%s346 + $0x50] sm:$0xff]
    %v358 = vld [vmem:[%s346 + $0x58] sm:$0xff]
    %v359 = vld [vmem:[%s346 + $0x60] sm:$0xff]
    %v360 = vld [vmem:[%s346 + $0x68] sm:$0xff]
    %v361 = vld [vmem:[%s346 + $0x70] sm:$0xff]
    %v362 = vld [vmem:[%s346 + $0x78] sm:$0xff]
    %s363 = scalar_lea.vmem %s4, 3
    %v364 = vld [vmem:[%s363] sm:$0x1]
    %v366 = vlaneseq
    %v367 = vshrl.u32 %v366, 7
    %v368 = vsub.s32 0, %v367
    %v369 = vrot.slane %v364, %v368
    %371 = vmatprep.subr.mxu0 0.0
    %372 = vmatpush1.msra.mxu0 %v347
    %373 = vmatprep.subr.mxu0 0.0
    %374 = vmatpush1.msra.mxu0 %v348
    %375 = vmatprep.subr.mxu0 0.0
    %376 = vmatpush1.msra.mxu0 %v349
    %377 = vmatprep.subr.mxu0 0.0
    %378 = vmatpush1.msra.mxu0 %v350
    %379 = vmatprep.subr.mxu0 0.0
    %380 = vmatpush1.msra.mxu0 %v351
    %381 = vmatprep.subr.mxu0 0.0
    %382 = vmatpush1.msra.mxu0 %v352
    %383 = vmatprep.subr.mxu0 0.0
    %384 = vmatpush1.msra.mxu0 %v353
    %385 = vmatprep.subr.mxu0 0.0
    %386 = vmatpush1.msra.mxu0 %v354
    %387 = vmatprep.subr.mxu0 0.0
    %388 = vmatpush1.msra.mxu0 %v355
    %389 = vmatprep.subr.mxu0 0.0
    %390 = vmatpush1.msra.mxu0 %v356
    %391 = vmatprep.subr.mxu0 0.0
    %392 = vmatpush1.msra.mxu0 %v357
    %393 = vmatprep.subr.mxu0 0.0
    %394 = vmatpush1.msra.mxu0 %v358
    %395 = vmatprep.subr.mxu0 0.0
    %396 = vmatpush1.msra.mxu0 %v359
    %397 = vmatprep.subr.mxu0 0.0
    %398 = vmatpush1.msra.mxu0 %v360
    %399 = vmatprep.subr.mxu0 0.0
    %400 = vmatpush1.msra.mxu0 %v361
    %401 = vmatprep.subr.mxu0 0.0
    %402 = vmatpush1.msra.mxu0 %v362
    %403 = vmatprep.subr.mxu0 0.0
    %404 = vmatpush1.msra.mxu0 0.0
    %405 = vmatprep.subr.mxu0 0.0
    %406 = vmatpush1.msra.mxu0 0.0
    %407 = vmatprep.subr.mxu0 0.0
    %408 = vmatpush1.msra.mxu0 0.0
    %409 = vmatprep.subr.mxu0 0.0
    %410 = vmatpush1.msra.mxu0 0.0
    %411 = vmatprep.subr.mxu0 0.0
    %412 = vmatpush1.msra.mxu0 0.0
    %413 = vmatprep.subr.mxu0 0.0
    %414 = vmatpush1.msra.mxu0 0.0
    %415 = vmatprep.subr.mxu0 0.0
    %416 = vmatpush1.msra.mxu0 0.0
    %417 = vmatprep.subr.mxu0 0.0
    %418 = vmatpush1.msra.mxu0 0.0
    %419 = vmatprep.subr.mxu0 0.0
    %420 = vmatpush1.msra.mxu0 0.0
    %421 = vmatprep.subr.mxu0 0.0
    %422 = vmatpush1.msra.mxu0 0.0
    %423 = vmatprep.subr.mxu0 0.0
    %424 = vmatpush1.msra.mxu0 0.0
    %425 = vmatprep.subr.mxu0 0.0
    %426 = vmatpush1.msra.mxu0 0.0
    %427 = vmatprep.subr.mxu0 0.0
    %428 = vmatpush1.msra.mxu0 0.0
    %429 = vmatprep.subr.mxu0 0.0
    %430 = vmatpush1.msra.mxu0 0.0
    %431 = vmatprep.subr.mxu0 0.0
    %432 = vmatpush1.msra.mxu0 0.0
    %433 = vmatprep.subr.mxu0 0.0
    %434 = vmatpush1.msra.mxu0 0.0
    %435 = vmatprep.mubr.f32.mxu0 0.0
    %436 = vmatmul.mubr.f32.gmra.mrb[0].mxu0 %v345
    %v437 = vpop.f32.mrb[0].mxu0
    %v438 = vadd.f32 %v369, %v437
    %v439 = vpop.f32.mrb[0].mxu0
    %440 = vdwg.mxu0
    %vm441 = vcmp.gt.f32.partialorder %v438, 0.0
    %v442 = vmul.f32 %v438, 0.01
    %v443 = vsel %vm441, %v438, %v442
    %s444 = scalar_lea.vmem [#allocation3], 512
    %v445 = vld [vmem:[%s444] sm:$0xff]
    %v446 = vld [vmem:[%s444 + $0x8] sm:$0xff]
    %v447 = vld [vmem:[%s444 + $0x10] sm:$0xff]
    %v448 = vld [vmem:[%s444 + $0x18] sm:$0xff]
    %v449 = vld [vmem:[%s444 + $0x20] sm:$0xff]
    %v450 = vld [vmem:[%s444 + $0x28] sm:$0xff]
    %v451 = vld [vmem:[%s444 + $0x30] sm:$0xff]
    %v452 = vld [vmem:[%s444 + $0x38] sm:$0xff]
    %v453 = vld [vmem:[%s444 + $0x40] sm:$0xff]
    %v454 = vld [vmem:[%s444 + $0x48] sm:$0xff]
    %v455 = vld [vmem:[%s444 + $0x50] sm:$0xff]
    %v456 = vld [vmem:[%s444 + $0x58] sm:$0xff]
    %v457 = vld [vmem:[%s444 + $0x60] sm:$0xff]
    %v458 = vld [vmem:[%s444 + $0x68] sm:$0xff]
    %v459 = vld [vmem:[%s444 + $0x70] sm:$0xff]
    %v460 = vld [vmem:[%s444 + $0x78] sm:$0xff]
    %s461 = scalar_lea.vmem %s4, 4
    %v462 = vld [vmem:[%s461] sm:$0x1]
    %v464 = vlaneseq
    %v465 = vshrl.u32 %v464, 7
    %v466 = vsub.s32 0, %v465
    %v467 = vrot.slane %v462, %v466
    %469 = vmatprep.subr.mxu0 0.0
    %470 = vmatpush1.msra.mxu0 %v445
    %471 = vmatprep.subr.mxu0 0.0
    %472 = vmatpush1.msra.mxu0 %v446
    %473 = vmatprep.subr.mxu0 0.0
    %474 = vmatpush1.msra.mxu0 %v447
    %475 = vmatprep.subr.mxu0 0.0
    %476 = vmatpush1.msra.mxu0 %v448
    %477 = vmatprep.subr.mxu0 0.0
    %478 = vmatpush1.msra.mxu0 %v449
    %479 = vmatprep.subr.mxu0 0.0
    %480 = vmatpush1.msra.mxu0 %v450
    %481 = vmatprep.subr.mxu0 0.0
    %482 = vmatpush1.msra.mxu0 %v451
    %483 = vmatprep.subr.mxu0 0.0
    %484 = vmatpush1.msra.mxu0 %v452
    %485 = vmatprep.subr.mxu0 0.0
    %486 = vmatpush1.msra.mxu0 %v453
    %487 = vmatprep.subr.mxu0 0.0
    %488 = vmatpush1.msra.mxu0 %v454
    %489 = vmatprep.subr.mxu0 0.0
    %490 = vmatpush1.msra.mxu0 %v455
    %491 = vmatprep.subr.mxu0 0.0
    %492 = vmatpush1.msra.mxu0 %v456
    %493 = vmatprep.subr.mxu0 0.0
    %494 = vmatpush1.msra.mxu0 %v457
    %495 = vmatprep.subr.mxu0 0.0
    %496 = vmatpush1.msra.mxu0 %v458
    %497 = vmatprep.subr.mxu0 0.0
    %498 = vmatpush1.msra.mxu0 %v459
    %499 = vmatprep.subr.mxu0 0.0
    %500 = vmatpush1.msra.mxu0 %v460
    %501 = vmatprep.subr.mxu0 0.0
    %502 = vmatpush1.msra.mxu0 0.0
    %503 = vmatprep.subr.mxu0 0.0
    %504 = vmatpush1.msra.mxu0 0.0
    %505 = vmatprep.subr.mxu0 0.0
    %506 = vmatpush1.msra.mxu0 0.0
    %507 = vmatprep.subr.mxu0 0.0
    %508 = vmatpush1.msra.mxu0 0.0
    %509 = vmatprep.subr.mxu0 0.0
    %510 = vmatpush1.msra.mxu0 0.0
    %511 = vmatprep.subr.mxu0 0.0
    %512 = vmatpush1.msra.mxu0 0.0
    %513 = vmatprep.subr.mxu0 0.0
    %514 = vmatpush1.msra.mxu0 0.0
    %515 = vmatprep.subr.mxu0 0.0
    %516 = vmatpush1.msra.mxu0 0.0
    %517 = vmatprep.subr.mxu0 0.0
    %518 = vmatpush1.msra.mxu0 0.0
    %519 = vmatprep.subr.mxu0 0.0
    %520 = vmatpush1.msra.mxu0 0.0
    %521 = vmatprep.subr.mxu0 0.0
    %522 = vmatpush1.msra.mxu0 0.0
    %523 = vmatprep.subr.mxu0 0.0
    %524 = vmatpush1.msra.mxu0 0.0
    %525 = vmatprep.subr.mxu0 0.0
    %526 = vmatpush1.msra.mxu0 0.0
    %527 = vmatprep.subr.mxu0 0.0
    %528 = vmatpush1.msra.mxu0 0.0
    %529 = vmatprep.subr.mxu0 0.0
    %530 = vmatpush1.msra.mxu0 0.0
    %531 = vmatprep.subr.mxu0 0.0
    %532 = vmatpush1.msra.mxu0 0.0
    %533 = vmatprep.mubr.f32.mxu0 0.0
    %534 = vmatmul.mubr.f32.gmra.mrb[0].mxu0 %v443
    %v535 = vpop.f32.mrb[0].mxu0
    %v536 = vadd.f32 %v467, %v535
    %v537 = vpop.f32.mrb[0].mxu0
    %538 = vdwg.mxu0
    %539 = vst [vmem:[#allocation6] sm:$0xff] %v536
    // Predicated region
    $region26: #{tpu_custom_call.1} parent=1 // pred_check
      _
    $region27: #{tpu_custom_call.1} parent=1 // pred_check_branch
      %541 = sbr.rel (0) target = $region29
    $region28: #{tpu_custom_call.1} parent=1 // pred_region
      %s543 = ssub.s32 128, 128
      %544 = vsyncadd [#allocation5], %s543
      %s546 = sshll.u32 [#allocation6], 4
      %s547 = int_to_ptr.vmem [resolvable:$true] %s546
      %549 = dma.vmem_to_hbm [thread:$0]  %s547, 128, %s5, [#allocation5]
    $region29: #{tpu_custom_call.1} parent=1 // pred_fallthru
      _
    // Predicated region
    $region30: #{tpu_custom_call.1} parent=1 // pred_check
      _
    $region31: #{tpu_custom_call.1} parent=1 // pred_check_branch
      %551 = sbr.rel (0) target = $region33
    $region32: #{tpu_custom_call.1} parent=1 // pred_region
      %552 = dma.done [#allocation5], 128
    $region33: #{tpu_custom_call.1} parent=1 // pred_fallthru
      _
    %553 = vsyncpa [#allocation4], 1
    %554 = vsyncpa [#allocation5], 1

</llo_original>
